<compile_context>
chip_gen: v5e
topology: v5e:2x2
jax: 0.10.0
libtpu: 0.0.40
codegen_flags: <defaults>
</compile_context>

<pallas_src>
import jax
import jax.numpy as jnp
from jax.experimental import pallas as pl
from jax.experimental.pallas import tpu as pltpu

BATCH = 16           # batch_size per forward() call
FEATURE_DIM = 128    # feature_dim (lane-dense: exactly one 128-lane vreg row)
EPS = 1e-12          # torch.nn.functional.normalize default eps
TILE_M = 256         # rows per grid step: fills v6e/v7x MXU, fine on v5e


def _proj_kernel(x_ref, w1_ref, b1_ref, w2_ref, b2_ref, o_ref):
    x = x_ref[...]                                                   # (M, D)

    # Linear 1 + ReLU  (MXU matmul, VPU bias/relu)
    h = jnp.dot(x, w1_ref[...], preferred_element_type=jnp.float32) + b1_ref[...]
    h = jnp.maximum(h, 0.0)

    # Linear 2
    p = jnp.dot(h, w2_ref[...], preferred_element_type=jnp.float32) + b2_ref[...]

    # L2 normalize along feature dim == F.normalize(p=2, dim=1, eps=1e-12).
    # Single EUP rsqrt on a (M, 1) column; EUP slot is otherwise idle.
    sum_sq = jnp.sum(p * p, axis=-1, keepdims=True)                  # (M, 1)
    inv = jax.lax.rsqrt(jnp.maximum(sum_sq, EPS * EPS))
    o_ref[...] = (p * inv).astype(o_ref.dtype)


def _single_shot_call(flat, w1_t, b1, w2_t, b2):
    """Small N: no grid, no pipeline buffers — everything pinned in VMEM."""
    N, D = flat.shape
    vmem = pl.BlockSpec(memory_space=pltpu.MemorySpace.VMEM)
    return pl.pallas_call(
        _proj_kernel,
        out_shape=jax.ShapeDtypeStruct((N, D), flat.dtype),
        in_specs=[vmem, vmem, vmem, vmem, vmem],
        out_specs=vmem,
    )(flat, w1_t, b1, w2_t, b2)


def _batched_call(flat, w1_t, b1, w2_t, b2, tile_m):
    """Large N (many stacked forward calls): grid over 256-row tiles.

    Weights / biases use a constant index_map -> DMA'd once, VMEM-resident
    across all grid steps.  Leading axis is 'parallel' for v7x's 2 TCs.
    """
    N, D = flat.shape
    assert N % tile_m == 0
    return pl.pallas_call(
        _proj_kernel,
        out_shape=jax.ShapeDtypeStruct((N, D), flat.dtype),
        grid_spec=pltpu.PrefetchScalarGridSpec(
            num_scalar_prefetch=0,
            grid=(N // tile_m,),
            in_specs=[
                pl.BlockSpec((tile_m, D), lambda n: (n, 0)),   # features tile
                pl.BlockSpec((D, D), lambda n: (0, 0)),        # W1^T (resident)
                pl.BlockSpec((1, D), lambda n: (0, 0)),        # b1   (resident)
                pl.BlockSpec((D, D), lambda n: (0, 0)),        # W2^T (resident)
                pl.BlockSpec((1, D), lambda n: (0, 0)),        # b2   (resident)
            ],
            out_specs=pl.BlockSpec((tile_m, D), lambda n: (n, 0)),
        ),
        compiler_params=pltpu.CompilerParams(
            dimension_semantics=("parallel",)),
    )(flat, w1_t, b1, w2_t, b2)


def contrastive_projection(features, w1_t, b1, w2_t, b2, *, tile_m=TILE_M):
    """features: (B, D) or (Nb, B, D).  w*_t are torch Linear weights
    pre-transposed to (in, out) so y = x @ W^T + b == F.linear(x, W, b)."""
    orig_shape = features.shape
    D = orig_shape[-1]
    flat = features.reshape(-1, D)
    N = flat.shape[0]

    if N <= tile_m:
        out = _single_shot_call(flat, w1_t, b1, w2_t, b2)
    else:
        pad = (-N) % tile_m
        if pad:
            flat = jnp.concatenate(
                [flat, jnp.zeros((pad, D), flat.dtype)], axis=0)
        out = _batched_call(flat, w1_t, b1, w2_t, b2, tile_m)
        if pad:
            out = out[:N]
    return out.reshape(orig_shape)


def reference_forward(features, w1_t, b1, w2_t, b2):
    orig_shape = features.shape
    x = features.reshape(-1, orig_shape[-1])
    h = jnp.maximum(x @ w1_t + b1, 0.0)
    p = h @ w2_t + b2
    norm = jnp.sqrt(jnp.sum(p * p, axis=-1, keepdims=True))
    return (p / jnp.maximum(norm, EPS)).reshape(orig_shape)


if __name__ == "__main__":
    key = jax.random.PRNGKey(0)
    kx, kxs, k1, kb1, k2, kb2 = jax.random.split(key, 6)

    # torch.nn.Linear stores W as (out, in); pass W.T = (in, out).
    bound = 1.0 / (FEATURE_DIM ** 0.5)
    w1 = jax.random.uniform(k1, (FEATURE_DIM, FEATURE_DIM), jnp.float32, -bound, bound)
    w2 = jax.random.uniform(k2, (FEATURE_DIM, FEATURE_DIM), jnp.float32, -bound, bound)
    b1 = jax.random.uniform(kb1, (1, FEATURE_DIM), jnp.float32, -bound, bound)
    b2 = jax.random.uniform(kb2, (1, FEATURE_DIM), jnp.float32, -bound, bound)
    w1_t, w2_t = w1.T, w2.T

    # ---- single forward() call: (16, 128), no-grid VMEM-resident path ----
    feats = jax.random.normal(kx, (BATCH, FEATURE_DIM), dtype=jnp.float32)
    out1 = jax.block_until_ready(contrastive_projection(feats, w1_t, b1, w2_t, b2))
    ref1 = reference_forward(feats, w1_t, b1, w2_t, b2)
    assert out1.shape == feats.shape
    assert jnp.allclose(out1, ref1, atol=1e-5, rtol=1e-5), "single-shot mismatch"

    # ---- 32 stacked forward() calls: (32, 16, 128) -> one pallas_call,
    #      grid of 2 x (256, 128) MXU passes, weights DMA'd once ----
    NB = 32
    feats_stacked = jax.random.normal(kxs, (NB, BATCH, FEATURE_DIM), dtype=jnp.float32)
    out2 = jax.block_until_ready(
        contrastive_projection(feats_stacked, w1_t, b1, w2_t, b2))
    ref2 = reference_forward(feats_stacked, w1_t, b1, w2_t, b2)
    assert out2.shape == feats_stacked.shape
    assert jnp.allclose(out2, ref2, atol=1e-5, rtol=1e-5), "batched mismatch"

    # TODO(synk): calculate_contrastive_loss (cross-entropy over similarity
    # logits) is a training-time loss outside forward(); not implemented here.

    print("KERNEL_OK")
</pallas_src>

<mosaic_0001>
module attributes {stable_mosaic.version = 11 : i64} {
  func.func @_proj_kernel(%arg0: memref<16x128xf32, #tpu.memory_space<vmem>>, %arg1: memref<128x128xf32, #tpu.memory_space<vmem>>, %arg2: memref<1x128xf32, #tpu.memory_space<vmem>>, %arg3: memref<128x128xf32, #tpu.memory_space<vmem>>, %arg4: memref<1x128xf32, #tpu.memory_space<vmem>>, %arg5: memref<16x128xf32, #tpu.memory_space<vmem>>) attributes {dimension_semantics = [], scalar_prefetch = 0 : i64, scratch_operands = 0 : i64, tpu.core_type = #tpu.core_type<tc>} {
    %c0 = arith.constant 0 : index
    %c0_0 = arith.constant 0 : index
    %0 = vector.load %arg0[%c0, %c0_0] : memref<16x128xf32, #tpu.memory_space<vmem>>, vector<16x128xf32>
    %c0_1 = arith.constant 0 : index
    %c0_2 = arith.constant 0 : index
    %1 = vector.load %arg1[%c0_1, %c0_2] : memref<128x128xf32, #tpu.memory_space<vmem>>, vector<128x128xf32>
    %cst = arith.constant dense<0.000000e+00> : vector<16x128xf32>
    %2 = tpu.matmul %0, %1, %cst {dimension_numbers = #tpu.dot_dimension_numbers<[1], [0], [0], [1], [0, 0, 1, 1], [], []>} : vector<16x128xf32>, vector<128x128xf32>, vector<16x128xf32> -> vector<16x128xf32>
    %c0_3 = arith.constant 0 : index
    %c0_4 = arith.constant 0 : index
    %3 = vector.load %arg2[%c0_3, %c0_4] : memref<1x128xf32, #tpu.memory_space<vmem>>, vector<1x128xf32>
    %4 = vector.broadcast %3 : vector<1x128xf32> to vector<16x128xf32>
    %5 = arith.addf %2, %4 : vector<16x128xf32>
    %cst_5 = arith.constant 0.000000e+00 : f32
    %6 = vector.broadcast %cst_5 : f32 to vector<16x128xf32>
    %7 = arith.maximumf %5, %6 : vector<16x128xf32>
    %c0_6 = arith.constant 0 : index
    %c0_7 = arith.constant 0 : index
    %8 = vector.load %arg3[%c0_6, %c0_7] : memref<128x128xf32, #tpu.memory_space<vmem>>, vector<128x128xf32>
    %cst_8 = arith.constant dense<0.000000e+00> : vector<16x128xf32>
    %9 = tpu.matmul %7, %8, %cst_8 {dimension_numbers = #tpu.dot_dimension_numbers<[1], [0], [0], [1], [0, 0, 1, 1], [], []>} : vector<16x128xf32>, vector<128x128xf32>, vector<16x128xf32> -> vector<16x128xf32>
    %c0_9 = arith.constant 0 : index
    %c0_10 = arith.constant 0 : index
    %10 = vector.load %arg4[%c0_9, %c0_10] : memref<1x128xf32, #tpu.memory_space<vmem>>, vector<1x128xf32>
    %11 = vector.broadcast %10 : vector<1x128xf32> to vector<16x128xf32>
    %12 = arith.addf %9, %11 : vector<16x128xf32>
    %13 = arith.mulf %12, %12 : vector<16x128xf32>
    %cst_11 = arith.constant dense<0.000000e+00> : vector<16xf32>
    %14 = vector.multi_reduction <add>, %13, %cst_11 [1] : vector<16x128xf32> to vector<16xf32>
    %15 = vector.shape_cast %14 : vector<16xf32> to vector<16x1xf32>
    %cst_12 = arith.constant 1.000000e-24 : f32
    %16 = vector.broadcast %cst_12 : f32 to vector<16x1xf32>
    %17 = arith.maximumf %15, %16 : vector<16x1xf32>
    %18 = math.rsqrt %17 : vector<16x1xf32>
    %19 = vector.broadcast %18 : vector<16x1xf32> to vector<16x128xf32>
    %20 = arith.mulf %12, %19 : vector<16x128xf32>
    %c0_13 = arith.constant 0 : index
    %c0_14 = arith.constant 0 : index
    %21 = vector.load %arg5[%c0_13, %c0_14] : memref<16x128xf32, #tpu.memory_space<vmem>>, vector<16x128xf32>
    tpu.vector_store %arg5[%c0_13, %c0_14], %20 {strides = array<i32>} : memref<16x128xf32, #tpu.memory_space<vmem>>, vector<16x128xf32>,
    return
  }
}

</mosaic_0001>

<llo_original>
// kernel: tpu_custom_call.1
$region0: #{tpu_custom_call.1}
  #allocation0 [shape = 'u32[]', space=smem, size = 0x4, offset = 0x4, fixed_abs, tag = 'smem constant byte address 0x4 - core index']
  #allocation1 [shape = 'u32[72,128]{1,0:T(1,128)}', space=vmem, size = 0x9000, scoped, tag = 'internal scratch']
  %s0 = inlined_call_operand.hbm [shape: f32[16,128], index: 0, kind: input, shape index: {}]
  %s1 = inlined_call_operand.hbm [shape: f32[128,128], index: 1, kind: input, shape index: {}]
  %s2 = inlined_call_operand.vmem [shape: f32[1,128], index: 2, kind: input, shape index: {}]
  %s3 = inlined_call_operand.hbm [shape: f32[128,128], index: 3, kind: input, shape index: {}]
  %s4 = inlined_call_operand.vmem [shape: f32[1,128], index: 4, kind: input, shape index: {}]
  %s5 = inlined_call_operand.hbm [shape: f32[16,128], index: 5, kind: output, shape index: {}]
  %s6 = sld [smem:[#allocation0]]
  $region42: #{tpu_custom_call.1} parent=0
    _
  %s8 = ssub.s32 1, %s6
  %s9 = scalar_select 0, %s8, %s6
  $region1: #{tpu_custom_call.1} parent=0
    #allocation2 [shape = 'u8[8192]{0}', space=vmem, size = 0x2000, scoped, tag = 'input window, operand 0, single buffered']
    #allocation3 [shape = 's32[1]{0}', space=sflag, size = 0x4, scoped, tag = 'scoped memory for tpu_custom_call.1']
    #allocation4 [shape = 's32[1]{0}', space=sflag, size = 0x4, scoped, tag = 'scoped memory for tpu_custom_call.1']
    #allocation5 [shape = 'u8[65536]{0}', space=vmem, size = 0x10000, scoped, tag = 'input window, operand 1, single buffered']
    #allocation6 [shape = 's32[1]{0}', space=sflag, size = 0x4, scoped, tag = 'scoped memory for tpu_custom_call.1']
    #allocation7 [shape = 'u8[65536]{0}', space=vmem, size = 0x10000, scoped, tag = 'input window, operand 3, single buffered']
    #allocation8 [shape = 'u8[8192]{0}', space=vmem, size = 0x2000, scoped, tag = 'output window, operand 0, single buffered']
    %10 = vsyncpa [#allocation3], 0
    %11 = vsyncpa [#allocation6], 0
    %12 = vsyncpa [#allocation4], 0
    // Predicated region
    $region2: #{tpu_custom_call.1} parent=1 // pred_check
      _
    $region3: #{tpu_custom_call.1} parent=1 // pred_check_branch
      %14 = sbr.rel (0) target = $region5
    $region4: #{tpu_custom_call.1} parent=1 // pred_region
      %16 = vsyncadd [#allocation3], 0
      %s17 = sshll.u32 %s0, 4
      %s18 = int_to_ptr.hbm [resolvable:$true] %s17
      %s19 = sshll.u32 [#allocation2], 4
      %s20 = int_to_ptr.vmem [resolvable:$true] %s19
      %25 = dma.hbm_to_vmem [thread:$0]  %s18, 256, %s20, [#allocation3], 128, 128, 8
    $region5: #{tpu_custom_call.1} parent=1 // pred_fallthru
      _
    // Predicated region
    $region6: #{tpu_custom_call.1} parent=1 // pred_check
      _
    $region7: #{tpu_custom_call.1} parent=1 // pred_check_branch
      %27 = sbr.rel (0) target = $region9
    $region8: #{tpu_custom_call.1} parent=1 // pred_region
      %29 = vsyncadd [#allocation6], 0
      %s30 = sshll.u32 %s1, 4
      %s31 = int_to_ptr.hbm [resolvable:$true] %s30
      %s32 = sshll.u32 [#allocation5], 4
      %s33 = int_to_ptr.vmem [resolvable:$true] %s32
      %38 = dma.hbm_to_vmem [thread:$0]  %s31, 2048, %s33, [#allocation6], 128, 128, 8
    $region9: #{tpu_custom_call.1} parent=1 // pred_fallthru
      _
    // Predicated region
    $region10: #{tpu_custom_call.1} parent=1 // pred_check
      _
    $region11: #{tpu_custom_call.1} parent=1 // pred_check_branch
      %40 = sbr.rel (0) target = $region13
    $region12: #{tpu_custom_call.1} parent=1 // pred_region
      _
    $region13: #{tpu_custom_call.1} parent=1 // pred_fallthru
      _
    // Predicated region
    $region14: #{tpu_custom_call.1} parent=1 // pred_check
      _
    $region15: #{tpu_custom_call.1} parent=1 // pred_check_branch
      %42 = sbr.rel (0) target = $region17
    $region16: #{tpu_custom_call.1} parent=1 // pred_region
      %44 = vsyncadd [#allocation6], 0
      %s45 = sshll.u32 %s3, 4
      %s46 = int_to_ptr.hbm [resolvable:$true] %s45
      %s47 = sshll.u32 [#allocation7], 4
      %s48 = int_to_ptr.vmem [resolvable:$true] %s47
      %53 = dma.hbm_to_vmem [thread:$0]  %s46, 2048, %s48, [#allocation6], 128, 128, 8
    $region17: #{tpu_custom_call.1} parent=1 // pred_fallthru
      _
    // Predicated region
    $region18: #{tpu_custom_call.1} parent=1 // pred_check
      _
    $region19: #{tpu_custom_call.1} parent=1 // pred_check_branch
      %55 = sbr.rel (0) target = $region21
    $region20: #{tpu_custom_call.1} parent=1 // pred_region
      _
    $region21: #{tpu_custom_call.1} parent=1 // pred_fallthru
      _
    // Predicated region
    $region22: #{tpu_custom_call.1} parent=1 // pred_check
      _
    $region23: #{tpu_custom_call.1} parent=1 // pred_check_branch
      %57 = sbr.rel (0) target = $region25
    $region24: #{tpu_custom_call.1} parent=1 // pred_region
      %59 = dma.done [#allocation3], 256
    $region25: #{tpu_custom_call.1} parent=1 // pred_fallthru
      _
    // Predicated region
    $region26: #{tpu_custom_call.1} parent=1 // pred_check
      _
    $region27: #{tpu_custom_call.1} parent=1 // pred_check_branch
      %61 = sbr.rel (0) target = $region29
    $region28: #{tpu_custom_call.1} parent=1 // pred_region
      %63 = dma.done [#allocation6], 2048
    $region29: #{tpu_custom_call.1} parent=1 // pred_fallthru
      _
    // Predicated region
    $region30: #{tpu_custom_call.1} parent=1 // pred_check
      _
    $region31: #{tpu_custom_call.1} parent=1 // pred_check_branch
      %65 = sbr.rel (0) target = $region33
    $region32: #{tpu_custom_call.1} parent=1 // pred_region
      %67 = dma.done [#allocation6], 2048
    $region33: #{tpu_custom_call.1} parent=1 // pred_fallthru
      _
    %v68 = vld [vmem:[#allocation2] sm:$0xff]
    %v69 = vld [vmem:[#allocation2 + $0x8] sm:$0xff]
    %v70 = vld [vmem:[#allocation5] sm:$0xff]
    %v71 = vld [vmem:[#allocation5 + $0x8] sm:$0xff]
    %v72 = vld [vmem:[#allocation5 + $0x10] sm:$0xff]
    %v73 = vld [vmem:[#allocation5 + $0x18] sm:$0xff]
    %v74 = vld [vmem:[#allocation5 + $0x20] sm:$0xff]
    %v75 = vld [vmem:[#allocation5 + $0x28] sm:$0xff]
    %v76 = vld [vmem:[#allocation5 + $0x30] sm:$0xff]
    %v77 = vld [vmem:[#allocation5 + $0x38] sm:$0xff]
    %v78 = vld [vmem:[#allocation5 + $0x40] sm:$0xff]
    %v79 = vld [vmem:[#allocation5 + $0x48] sm:$0xff]
    %v80 = vld [vmem:[#allocation5 + $0x50] sm:$0xff]
    %v81 = vld [vmem:[#allocation5 + $0x58] sm:$0xff]
    %v82 = vld [vmem:[#allocation5 + $0x60] sm:$0xff]
    %v83 = vld [vmem:[#allocation5 + $0x68] sm:$0xff]
    %v84 = vld [vmem:[#allocation5 + $0x70] sm:$0xff]
    %v85 = vld [vmem:[#allocation5 + $0x78] sm:$0xff]
    %v86 = vld [vmem:[%s2] sm:$0x1]
    %v88 = vperm.slane %v86, 0
    %90 = vmatpush.msra.mxu0 %v85
    %91 = vmatpush.msra.mxu0 %v84
    %92 = vmatpush.msra.mxu0 %v83
    %93 = vmatpush.msra.mxu0 %v82
    %94 = vmatpush.msra.mxu0 %v81
    %95 = vmatpush.msra.mxu0 %v80
    %96 = vmatpush.msra.mxu0 %v79
    %97 = vmatpush.msra.mxu0 %v78
    %98 = vmatpush.msra.mxu0 %v77
    %99 = vmatpush.msra.mxu0 %v76
    %100 = vmatpush.msra.mxu0 %v75
    %101 = vmatpush.msra.mxu0 %v74
    %102 = vmatpush.msra.mxu0 %v73
    %103 = vmatpush.msra.mxu0 %v72
    %104 = vmatpush.msra.mxu0 %v71
    %105 = vmatpush.msra.mxu0 %v70
    %106 = vmatmul.f32.gmra.mxu0 %v68
    %v107 = vpop.f32.mrf.mxu0
    %v108 = vadd.f32 %v88, %v107
    %109 = vmatmul.f32.gmra.mxu0 %v69
    %v110 = vpop.f32.mrf.mxu0
    %v111 = vadd.f32 %v88, %v110
    %112 = vdwg.mxu0
    %v113 = vmax.f32 %v108, 0.0
    %v114 = vmax.f32 %v111, 0.0
    %v115 = vld [vmem:[#allocation7] sm:$0xff]
    %v116 = vld [vmem:[#allocation7 + $0x8] sm:$0xff]
    %v117 = vld [vmem:[#allocation7 + $0x10] sm:$0xff]
    %v118 = vld [vmem:[#allocation7 + $0x18] sm:$0xff]
    %v119 = vld [vmem:[#allocation7 + $0x20] sm:$0xff]
    %v120 = vld [vmem:[#allocation7 + $0x28] sm:$0xff]
    %v121 = vld [vmem:[#allocation7 + $0x30] sm:$0xff]
    %v122 = vld [vmem:[#allocation7 + $0x38] sm:$0xff]
    %v123 = vld [vmem:[#allocation7 + $0x40] sm:$0xff]
    %v124 = vld [vmem:[#allocation7 + $0x48] sm:$0xff]
    %v125 = vld [vmem:[#allocation7 + $0x50] sm:$0xff]
    %v126 = vld [vmem:[#allocation7 + $0x58] sm:$0xff]
    %v127 = vld [vmem:[#allocation7 + $0x60] sm:$0xff]
    %v128 = vld [vmem:[#allocation7 + $0x68] sm:$0xff]
    %v129 = vld [vmem:[#allocation7 + $0x70] sm:$0xff]
    %v130 = vld [vmem:[#allocation7 + $0x78] sm:$0xff]
    %v131 = vld [vmem:[%s4] sm:$0x1]
    %v133 = vperm.slane %v131, 0
    %135 = vmatpush.msra.mxu0 %v130
    %136 = vmatpush.msra.mxu0 %v129
    %137 = vmatpush.msra.mxu0 %v128
    %138 = vmatpush.msra.mxu0 %v127
    %139 = vmatpush.msra.mxu0 %v126
    %140 = vmatpush.msra.mxu0 %v125
    %141 = vmatpush.msra.mxu0 %v124
    %142 = vmatpush.msra.mxu0 %v123
    %143 = vmatpush.msra.mxu0 %v122
    %144 = vmatpush.msra.mxu0 %v121
    %145 = vmatpush.msra.mxu0 %v120
    %146 = vmatpush.msra.mxu0 %v119
    %147 = vmatpush.msra.mxu0 %v118
    %148 = vmatpush.msra.mxu0 %v117
    %149 = vmatpush.msra.mxu0 %v116
    %150 = vmatpush.msra.mxu0 %v115
    %151 = vmatmul.f32.gmra.mxu0 %v113
    %v152 = vpop.f32.mrf.mxu0
    %v153 = vadd.f32 %v133, %v152
    %154 = vmatmul.f32.gmra.mxu0 %v114
    %v155 = vpop.f32.mrf.mxu0
    %v156 = vadd.f32 %v133, %v155
    %157 = vdwg.mxu0
    %v158 = vmul.f32 %v153, %v153
    %v159 = vmul.f32 %v156, %v156
    %160 = vadd.xlane.f32.xlu0 %v158
    %v161 = vpop.xlane.xlu0 %160
    %162 = vadd.xlane.f32.xlu0 %v159
    %v163 = vpop.xlane.xlu0 %162
    %v164 = vmax.f32 %v161, 1e-24
    %v165 = vmax.f32 %v163, 1e-24
    %v166 = vrsqrt.pop %v164
    %v167 = vmul.f32 %v166, %v164
    %v168 = vmul.f32 %v167, %v166
    %v169 = vmul.f32 0.5, %v168
    %v170 = vsub.f32 1.5, %v169
    %v171 = vmul.f32 %v166, %v170
    %vm172 = vweird.f32 %v164
    %vm173 = vweird.f32 %v166
    %vm174 = vmor %vm172, %vm173
    %v175 = vsel %vm174, %v166, %v171
    %v176 = vrsqrt.pop %v165
    %v177 = vmul.f32 %v176, %v165
    %v178 = vmul.f32 %v177, %v176
    %v179 = vmul.f32 0.5, %v178
    %v180 = vsub.f32 1.5, %v179
    %v181 = vmul.f32 %v176, %v180
    %vm182 = vweird.f32 %v165
    %vm183 = vweird.f32 %v176
    %vm184 = vmor %vm182, %vm183
    %v185 = vsel %vm184, %v176, %v181
    %v186 = vmul.f32 %v153, %v175
    %v187 = vmul.f32 %v156, %v185
    %188 = vst [vmem:[#allocation8] sm:$0xff] %v186
    %189 = vst [vmem:[#allocation8 + $0x8] sm:$0xff] %v187
    // Predicated region
    $region34: #{tpu_custom_call.1} parent=1 // pred_check
      _
    $region35: #{tpu_custom_call.1} parent=1 // pred_check_branch
      %191 = sbr.rel (0) target = $region37
    $region36: #{tpu_custom_call.1} parent=1 // pred_region
      %193 = vsyncadd [#allocation4], 0
      %s194 = sshll.u32 [#allocation8], 4
      %s195 = int_to_ptr.vmem [resolvable:$true] %s194
      %s196 = sshll.u32 %s5, 4
      %s197 = int_to_ptr.hbm [resolvable:$true] %s196
      %202 = dma.vmem_to_hbm [thread:$0]  %s195, 256, %s197, [#allocation4], 128, 128, 8
    $region37: #{tpu_custom_call.1} parent=1 // pred_fallthru
      _
    // Predicated region
    $region38: #{tpu_custom_call.1} parent=1 // pred_check
      _
    $region39: #{tpu_custom_call.1} parent=1 // pred_check_branch
      %204 = sbr.rel (0) target = $region41
    $region40: #{tpu_custom_call.1} parent=1 // pred_region
      %206 = dma.done [#allocation4], 256
    $region41: #{tpu_custom_call.1} parent=1 // pred_fallthru
      _
    %207 = vsyncpa [#allocation3], 1
    %208 = vsyncpa [#allocation6], 1
    %209 = vsyncpa [#allocation4], 1

</llo_original>
